<compile_context>
chip_gen: v7x
topology: tpu7x:2x2x1
jax: 0.10.0
libtpu: 0.0.40
codegen_flags: <defaults>
</compile_context>

<pallas_src>
import jax
import jax.numpy as jnp
from jax.experimental import pallas as pl
from jax.experimental.pallas import tpu as pltpu


def _round_up(a: int, b: int) -> int:
    return ((a + b - 1) // b) * b


def _largest_tile_rows(rows: int, target_rows: int) -> int:
    """Largest tile_rows that is a multiple of 8, divides `rows`, <= target."""
    m = rows // 8
    t_max = max(1, min(m, target_rows // 8))
    for t in range(t_max, 0, -1):
        if m % t == 0:
            return 8 * t
    return 8


def _energy_partial_kernel(x_ref, psum_ref):
    # x_ref block: (slabs_per_tile, 8, lane).  Reduce the leading (slab) axis
    # with plain vreg multiply/adds on the VPU; accumulate in f32.
    xf = x_ref[...].astype(jnp.float32)
    psum_ref[...] = jnp.sum(xf * xf, axis=0)


def energy_layer_forward(x, *, lane=512, target_tile_rows=1024):
    """Mirrors energy_layer.forward.

    Returns (x, mean_sq) where mean_sq = mean(x**2) is computed on-TPU by the
    Pallas kernel; x is returned unchanged.  The host-side print() side
    effect is the caller's responsibility (done in __main__ below).
    """
    n = x.size
    flat = x.reshape(-1)
    itemsize = jnp.dtype(x.dtype).itemsize

    rows_needed = -(-n // lane)  # ceil(n / lane)

    # --- choose tiling -----------------------------------------------------
    fast_path = (n % lane == 0) and (rows_needed % 8 == 0)
    if fast_path:
        rows = rows_needed
        tile_rows = _largest_tile_rows(rows, target_tile_rows)
        # If the only exact divisor is tiny (awkward factorization) the
        # per-step pipeline overhead dominates; fall back to the padded path.
        if tile_rows < min(rows, 256):
            fast_path = False

    if not fast_path:
        tile_rows = min(target_tile_rows, _round_up(rows_needed, 8))
        rows = _round_up(rows_needed, tile_rows)
        padded = rows * lane
        if padded != n:
            # Zero padding contributes 0 to sum(x**2); mean divides by n.
            flat = jnp.pad(flat, (0, padded - n))

    # View as (rows//8, 8, lane): block's last two dims equal the full array
    # dims -> (8, 128)-aligned, no in-kernel reshape.  Reshape of a
    # contiguous buffer is free; only the (rare) pad above copies.
    x3d = flat.reshape(rows // 8, 8, lane)
    grid = rows // tile_rows
    slabs_per_tile = tile_rows // 8

    out_bytes = grid * 8 * lane * 4
    cost = pl.CostEstimate(
        flops=2 * rows * lane,                      # square + accumulate
        transcendentals=0,
        bytes_accessed=rows * lane * itemsize + out_bytes,
    )

    psums = pl.pallas_call(
        _energy_partial_kernel,
        out_shape=jax.ShapeDtypeStruct((grid * 8, lane), jnp.float32),
        grid_spec=pltpu.PrefetchScalarGridSpec(
            num_scalar_prefetch=0,
            grid=(grid,),
            in_specs=[
                pl.BlockSpec((slabs_per_tile, 8, lane), lambda i: (i, 0, 0)),
            ],
            out_specs=pl.BlockSpec((8, lane), lambda i: (i, 0)),
        ),
        compiler_params=pltpu.CompilerParams(
            # Each grid step writes its own output block -> fully parallel
            # (v7x can shard the HBM read across both TensorCores).
            dimension_semantics=("parallel",),
        ),
        cost_estimate=cost,
    )(x3d)

    # Tiny final reduction (grid*8 x lane f32) done by XLA in the wrapper.
    mean_sq = jnp.sum(psums) / jnp.float32(n)

    # The module returns x unchanged -- no materialized identity copy.
    return x, mean_sq


if __name__ == "__main__":
    key = jax.random.PRNGKey(0)
    x = jax.random.normal(key, (2, 4, 16, 16), dtype=jnp.float32)

    y, mean_sq = energy_layer_forward(x)
    y = jax.block_until_ready(y)
    mean_sq = jax.block_until_ready(mean_sq)

    # forward() prints mean(x**2).item(); mirror that side effect here.
    # TODO(synk): the print() is a host-side side effect, not a TPU op.
    print(float(mean_sq))

    # Sanity checks: identity return + correct reduction.
    ref_mean = jnp.mean(jnp.square(x))
    assert jnp.allclose(y, x), "identity return mismatch"
    assert jnp.allclose(mean_sq, ref_mean, rtol=1e-5, atol=1e-6), "mean mismatch"

    print("KERNEL_OK")
</pallas_src>

<mosaic_0001>
module attributes {stable_mosaic.version = 11 : i64} {
  func.func @_energy_partial_kernel(%arg0: i32, %arg1: memref<1x8x512xf32, #tpu.memory_space<vmem>>, %arg2: memref<8x512xf32, #tpu.memory_space<vmem>>) attributes {dimension_semantics = [#tpu.dimension_semantics<parallel>], iteration_bounds = array<i64: 1>, scalar_prefetch = 0 : i64, scratch_operands = 0 : i64, tpu.core_type = #tpu.core_type<tc>, window_params = [{transform_indices = @transform_0, window_bounds = array<i64: 1, 8, 512>}, {transform_indices = @transform_1, window_bounds = array<i64: 8, 512>}]} {
    %c0 = arith.constant 0 : index
    %c0_0 = arith.constant 0 : index
    %c0_1 = arith.constant 0 : index
    %0 = vector.load %arg1[%c0, %c0_0, %c0_1] : memref<1x8x512xf32, #tpu.memory_space<vmem>>, vector<1x8x512xf32>
    %1 = arith.mulf %0, %0 : vector<1x8x512xf32>
    %cst = arith.constant dense<0.000000e+00> : vector<8x512xf32>
    %2 = vector.multi_reduction <add>, %1, %cst [0] : vector<1x8x512xf32> to vector<8x512xf32>
    %c0_2 = arith.constant 0 : index
    %c0_3 = arith.constant 0 : index
    %3 = vector.load %arg2[%c0_2, %c0_3] : memref<8x512xf32, #tpu.memory_space<vmem>>, vector<8x512xf32>
    tpu.vector_store %arg2[%c0_2, %c0_3], %2 {strides = array<i32>} : memref<8x512xf32, #tpu.memory_space<vmem>>, vector<8x512xf32>,
    return
  }
  func.func @transform_0(%arg0: i32) -> (i32, i32, i32) {
    %c0_i32 = arith.constant 0 : i32
    %c0_i32_0 = arith.constant 0 : i32
    %c0_i32_1 = arith.constant 0 : i32
    return %arg0, %c0_i32, %c0_i32_0 : i32, i32, i32
  }
  func.func @transform_1(%arg0: i32) -> (i32, i32) {
    %c0_i32 = arith.constant 0 : i32
    %c0_i32_0 = arith.constant 0 : i32
    return %arg0, %c0_i32 : i32, i32
  }
}

</mosaic_0001>

<llo_original>
// kernel: tpu_custom_call.1
$region0: #{tpu_custom_call.1}
  #allocation0 [shape = 'u32[]', space=smem, size = 0x4, offset = 0x4, fixed_abs, tag = 'smem constant byte address 0x4 - core index']
  #allocation1 [shape = 'u32[144,128]{1,0:T(1,128)}', space=vmem, size = 0x12000, scoped, tag = 'internal scratch']
  %s0 = inlined_call_operand.hbm [shape: f32[1,8,512], index: 0, kind: input, shape index: {}]
  %s1 = inlined_call_operand.hbm [shape: f32[8,512], index: 1, kind: output, shape index: {}]
  %s2 = sld [smem:[#allocation0]]
  $region18: #{tpu_custom_call.1} parent=0
    _
  %s4 = ssub.s32 1, %s2
  %s5 = scalar_select 0, %s4, %s2
  $region1: #{tpu_custom_call.1} parent=0
    #allocation2 [shape = 'u8[16384]{0}', space=vmem, size = 0x4000, scoped, tag = 'input window, operand 0, single buffered']
    #allocation3 [shape = 's32[1]{0}', space=sflag, size = 0x4, scoped, tag = 'scoped memory for tpu_custom_call.1']
    #allocation4 [shape = 's32[1]{0}', space=sflag, size = 0x4, scoped, tag = 'scoped memory for tpu_custom_call.1']
    #allocation5 [shape = 'u8[16384]{0}', space=vmem, size = 0x4000, scoped, tag = 'output window, operand 0, single buffered']
    %6 = vsyncpa [#allocation3], 0
    %7 = vsyncpa [#allocation4], 0
    // Predicated region
    $region2: #{tpu_custom_call.1} parent=1 // pred_check
      _
    $region3: #{tpu_custom_call.1} parent=1 // pred_check_branch
      %9 = sbr.rel (0) target = $region5
    $region4: #{tpu_custom_call.1} parent=1 // pred_region
      %s11 = ssub.s32 512, 512
      %12 = vsyncadd [#allocation3], %s11
      %s14 = sshll.u32 [#allocation2], 4
      %s15 = int_to_ptr.vmem [resolvable:$true] %s14
      %17 = dma.hbm_to_vmem [thread:$0]  %s0, 512, %s15, [#allocation3]
    $region5: #{tpu_custom_call.1} parent=1 // pred_fallthru
      _
    // Predicated region
    $region6: #{tpu_custom_call.1} parent=1 // pred_check
      _
    $region7: #{tpu_custom_call.1} parent=1 // pred_check_branch
      %19 = sbr.rel (0) target = $region9
    $region8: #{tpu_custom_call.1} parent=1 // pred_region
      %20 = dma.done [#allocation3], 512
    $region9: #{tpu_custom_call.1} parent=1 // pred_fallthru
      _
    %v21 = vld [vmem:[#allocation2] sm:$0xff]
    %v22 = vld [vmem:[#allocation2 + $0x8] sm:$0xff]
    %v23 = vld [vmem:[#allocation2 + $0x10] sm:$0xff]
    %v24 = vld [vmem:[#allocation2 + $0x18] sm:$0xff]
    %v25 = vmul.f32 %v21, %v21
    %v26 = vmul.f32 %v22, %v22
    %v27 = vmul.f32 %v23, %v23
    %v28 = vmul.f32 %v24, %v24
    %v29 = vadd.f32 %v25, 0.0
    %v30 = vadd.f32 %v26, 0.0
    %v31 = vadd.f32 %v27, 0.0
    %v32 = vadd.f32 %v28, 0.0
    %33 = vst [vmem:[#allocation5] sm:$0xff] %v29
    %34 = vst [vmem:[#allocation5 + $0x8] sm:$0xff] %v30
    %35 = vst [vmem:[#allocation5 + $0x10] sm:$0xff] %v31
    %36 = vst [vmem:[#allocation5 + $0x18] sm:$0xff] %v32
    // Predicated region
    $region10: #{tpu_custom_call.1} parent=1 // pred_check
      _
    $region11: #{tpu_custom_call.1} parent=1 // pred_check_branch
      %38 = sbr.rel (0) target = $region13
    $region12: #{tpu_custom_call.1} parent=1 // pred_region
      %s40 = ssub.s32 512, 512
      %41 = vsyncadd [#allocation4], %s40
      %s43 = sshll.u32 [#allocation5], 4
      %s44 = int_to_ptr.vmem [resolvable:$true] %s43
      %46 = dma.vmem_to_hbm [thread:$0]  %s44, 512, %s1, [#allocation4]
    $region13: #{tpu_custom_call.1} parent=1 // pred_fallthru
      _
    // Predicated region
    $region14: #{tpu_custom_call.1} parent=1 // pred_check
      _
    $region15: #{tpu_custom_call.1} parent=1 // pred_check_branch
      %48 = sbr.rel (0) target = $region17
    $region16: #{tpu_custom_call.1} parent=1 // pred_region
      %49 = dma.done [#allocation4], 512
    $region17: #{tpu_custom_call.1} parent=1 // pred_fallthru
      _
    %50 = vsyncpa [#allocation3], 1
    %51 = vsyncpa [#allocation4], 1

</llo_original>
